<compile_context>
chip_gen: v6e
topology: v6e:2x2x1
jax: 0.10.0
libtpu: 0.0.40
codegen_flags: <defaults>
</compile_context>

<pallas_src>
import jax
import jax.numpy as jnp
from jax.experimental import pallas as pl
from jax.experimental.pallas import tpu as pltpu

# ---- config (mirrors args / num_nodes in the PyTorch module) ---------------
NUM_NODES = 8          # num_nodes (N)
CHEB_K = 3             # args.cheb_k (K)  -- must be >= 2 (as in the reference)
DIM_SHORT_HIDDEN = 4   # args.dim_short_hidden (I)
DIM_GCN_HIDDEN = 32    # args.dim_gcn_hidden (H)
DIM_GRAPH = 16         # args.dim_graph (D)
BATCH = 8              # >= 8 fills all 8 vreg sublanes / MXU rows (perf review)

N, K, I, H, D, B = NUM_NODES, CHEB_K, DIM_SHORT_HIDDEN, DIM_GCN_HIDDEN, DIM_GRAPH, BATCH


# ---- fused kernel -----------------------------------------------------------
# g1_ref   : (N, D)
# x_ref    : (B, N*I)        x_ref[b, n*I + i] = x[b, n, i]   (native layout)
# wbd_ref  : (K, N*I, N*H)   wbd[k, m*I+i, n*H+h] = W[n,k,i,h] * delta(m, n)
# bias_ref : (1, N*H)
# rep_ref  : (N*I, N)        rep[m*I+i, n]       = delta(m, n)
# rep_t_ref: (N, N*I)        rep.T
# mask_ref : (N*I, N*I)      mask[m*I+i, n*I+j]  = delta(i, j)
# out_ref  : (B, N*H)        lane-dense output slab (reshaped to (B,N,H) outside)
def gcn_fused_kernel(g1_ref, x_ref, wbd_ref, bias_ref, rep_ref, rep_t_ref,
                     mask_ref, out_ref):
    # --- graph construction: G = softmax(relu(G1 @ G1.T), axis=-1) ----------
    g1 = g1_ref[...]                                                   # (N, D)
    a = jnp.dot(g1, g1.T, preferred_element_type=jnp.float32)          # (N, N)
    a = jnp.maximum(a, 0.0)
    e = jnp.exp(a - jnp.max(a, axis=-1, keepdims=True))
    # approximate reciprocal -> EUP slot (otherwise idle)
    g = e * pl.reciprocal(jnp.sum(e, axis=-1, keepdims=True), approx=True)

    # --- Mx = G^T (kron) I_I, built on the MXU: mask * (R @ G^T @ R^T) ------
    tiled = jnp.dot(
        jnp.dot(rep_ref[...], g.T, preferred_element_type=jnp.float32),
        rep_t_ref[...], preferred_element_type=jnp.float32)            # (N*I, N*I)
    mx = mask_ref[...] * tiled

    # --- Chebyshev recurrence in native x layout -----------------------------
    #   y_k[b, n*I + i] = (T_k @ x_b)[n, i];   y_k = 2 * y_{k-1} @ Mx - y_{k-2}
    # (K >= 2 assumed, as in the PyTorch reference.)
    y_prev = x_ref[...]                                                 # T_0 x = x
    y_cur = jnp.dot(y_prev, mx, preferred_element_type=jnp.float32)     # T_1 x = G x

    # --- fused (k,i) contraction: sum of K MXU matmuls, no lane concat -------
    acc = (jnp.dot(y_prev, wbd_ref[0], preferred_element_type=jnp.float32)
           + jnp.dot(y_cur, wbd_ref[1], preferred_element_type=jnp.float32)
           + bias_ref[...])
    for k in range(2, K):                                               # static unroll
        y_next = 2.0 * jnp.dot(y_cur, mx, preferred_element_type=jnp.float32) - y_prev
        acc = acc + jnp.dot(y_next, wbd_ref[k], preferred_element_type=jnp.float32)
        y_prev, y_cur = y_cur, y_next

    out_ref[...] = acc.astype(out_ref.dtype)


# ---- one-time parameter packing (load time, outside the per-call jit) -------
def prepare_gcn_params(weights, bias):
    """Pack parameters once. weights: (N,K,I,H), bias: (N,H)."""
    n, k, i, h = weights.shape
    eye_n = jnp.eye(n, dtype=jnp.float32)
    # wbd[k, m*I+i, n*H+h] = weights[n, k, i, h] * delta(m, n)
    wbd = jnp.einsum('nkih,mn->kminh', weights.astype(jnp.float32), eye_n)
    wbd = wbd.reshape(k, n * i, n * h)
    bias_row = bias.astype(jnp.float32).reshape(1, n * h)
    rep = jnp.repeat(eye_n, i, axis=0)                                  # (N*I, N)
    mask = jnp.kron(jnp.ones((n, n), jnp.float32),
                    jnp.eye(i, dtype=jnp.float32))                      # (N*I, N*I)
    return wbd, bias_row, rep, rep.T, mask


# ---- per-call forward (only a free contiguous reshape in the jit path) ------
@jax.jit
def gcn_forward(x, g1, wbd, bias_row, rep, rep_t, mask):
    b, n, i = x.shape
    nh = bias_row.shape[-1]
    xflat = x.reshape(b, n * i)            # contiguous reshape; no transpose/copy

    vmem = pl.BlockSpec(memory_space=pltpu.MemorySpace.VMEM)
    out_flat = pl.pallas_call(
        gcn_fused_kernel,
        out_shape=jax.ShapeDtypeStruct((b, nh), jnp.float32),
        in_specs=[vmem] * 7,
        out_specs=vmem,
    )(g1, xflat, wbd, bias_row, rep, rep_t, mask)

    x_gconv = out_flat.reshape(b, n, nh // n)
    return x_gconv, g1                      # module returns (x_gconv, self.G1)


# ---- pure-JAX reference (mirrors the PyTorch forward) ------------------------
def gcn_reference(x, weights, bias, g1):
    g = jax.nn.softmax(jax.nn.relu(g1 @ g1.T), axis=-1)
    g_set = [jnp.eye(g1.shape[0], dtype=jnp.float32), g]
    for _ in range(2, CHEB_K):
        g_set.append(2.0 * (g @ g_set[-1]) - g_set[-2])
    G = jnp.stack(g_set, axis=0)
    x_g = jnp.einsum('knm,bmi->bkni', G, x)
    x_g = jnp.transpose(x_g, (0, 2, 1, 3))
    return jnp.einsum('bnki,nkih->bnh', x_g, weights) + bias


if __name__ == "__main__":
    key = jax.random.PRNGKey(0)
    k1, k2, k3, k4 = jax.random.split(key, 4)

    x = jax.random.normal(k1, (BATCH, NUM_NODES, DIM_SHORT_HIDDEN), jnp.float32)
    weights = 0.1 * jax.random.normal(
        k2, (NUM_NODES, CHEB_K, DIM_SHORT_HIDDEN, DIM_GCN_HIDDEN), jnp.float32)
    bias = 0.1 * jax.random.normal(k3, (NUM_NODES, DIM_GCN_HIDDEN), jnp.float32)
    g1 = 0.1 * jax.random.normal(k4, (NUM_NODES, DIM_GRAPH), jnp.float32)

    # One-time packing (parameter-load time in a real model).
    params = jax.block_until_ready(prepare_gcn_params(weights, bias))

    out, g1_out = gcn_forward(x, g1, *params)
    jax.block_until_ready(out)

    ref = gcn_reference(x, weights, bias, g1)
    # Tolerance loosened slightly for the approximate EUP reciprocal in softmax.
    assert jnp.allclose(out, ref, atol=3e-3, rtol=3e-3), "Pallas output mismatch"
    assert jnp.array_equal(g1_out, g1)

    print("KERNEL_OK")
</pallas_src>

<mosaic_0001>
module attributes {stable_mosaic.version = 11 : i64} {
  func.func @gcn_fused_kernel(%arg0: memref<8x16xf32, #tpu.memory_space<vmem>>, %arg1: memref<8x32xf32, #tpu.memory_space<vmem>>, %arg2: memref<3x32x256xf32, #tpu.memory_space<vmem>>, %arg3: memref<1x256xf32, #tpu.memory_space<vmem>>, %arg4: memref<32x8xf32, #tpu.memory_space<vmem>>, %arg5: memref<8x32xf32, #tpu.memory_space<vmem>>, %arg6: memref<32x32xf32, #tpu.memory_space<vmem>>, %arg7: memref<8x256xf32, #tpu.memory_space<vmem>>) attributes {dimension_semantics = [], scalar_prefetch = 0 : i64, scratch_operands = 0 : i64, tpu.core_type = #tpu.core_type<tc>} {
    %c0 = arith.constant 0 : index
    %c0_0 = arith.constant 0 : index
    %0 = vector.load %arg0[%c0, %c0_0] : memref<8x16xf32, #tpu.memory_space<vmem>>, vector<8x16xf32>
    %1 = tpu.transpose %0, [1, 0] : vector<8x16xf32> -> vector<16x8xf32>
    %cst = arith.constant dense<0.000000e+00> : vector<8x8xf32>
    %2 = tpu.matmul %0, %1, %cst {dimension_numbers = #tpu.dot_dimension_numbers<[1], [0], [0], [1], [0, 0, 1, 1], [], []>} : vector<8x16xf32>, vector<16x8xf32>, vector<8x8xf32> -> vector<8x8xf32>
    %cst_1 = arith.constant 0.000000e+00 : f32
    %3 = vector.broadcast %cst_1 : f32 to vector<8x8xf32>
    %4 = arith.maximumf %2, %3 : vector<8x8xf32>
    %cst_2 = arith.constant dense<0xFF800000> : vector<8xf32>
    %5 = vector.multi_reduction <maximumf>, %4, %cst_2 [1] : vector<8x8xf32> to vector<8xf32>
    %6 = vector.shape_cast %5 : vector<8xf32> to vector<8x1xf32>
    %7 = vector.broadcast %6 : vector<8x1xf32> to vector<8x8xf32>
    %8 = arith.subf %4, %7 : vector<8x8xf32>
    %9 = math.exp %8 : vector<8x8xf32>
    %cst_3 = arith.constant dense<0.000000e+00> : vector<8xf32>
    %10 = vector.multi_reduction <add>, %9, %cst_3 [1] : vector<8x8xf32> to vector<8xf32>
    %11 = vector.shape_cast %10 : vector<8xf32> to vector<8x1xf32>
    %12 = tpu.reciprocal %11 {approx = true} : vector<8x1xf32> -> vector<8x1xf32>
    %13 = vector.broadcast %12 : vector<8x1xf32> to vector<8x8xf32>
    %14 = arith.mulf %9, %13 : vector<8x8xf32>
    %c0_4 = arith.constant 0 : index
    %c0_5 = arith.constant 0 : index
    %15 = vector.load %arg4[%c0_4, %c0_5] : memref<32x8xf32, #tpu.memory_space<vmem>>, vector<32x8xf32>
    %16 = tpu.transpose %14, [1, 0] : vector<8x8xf32> -> vector<8x8xf32>
    %cst_6 = arith.constant dense<0.000000e+00> : vector<32x8xf32>
    %17 = tpu.matmul %15, %16, %cst_6 {dimension_numbers = #tpu.dot_dimension_numbers<[1], [0], [0], [1], [0, 0, 1, 1], [], []>} : vector<32x8xf32>, vector<8x8xf32>, vector<32x8xf32> -> vector<32x8xf32>
    %c0_7 = arith.constant 0 : index
    %c0_8 = arith.constant 0 : index
    %18 = vector.load %arg5[%c0_7, %c0_8] : memref<8x32xf32, #tpu.memory_space<vmem>>, vector<8x32xf32>
    %cst_9 = arith.constant dense<0.000000e+00> : vector<32x32xf32>
    %19 = tpu.matmul %17, %18, %cst_9 {dimension_numbers = #tpu.dot_dimension_numbers<[1], [0], [0], [1], [0, 0, 1, 1], [], []>} : vector<32x8xf32>, vector<8x32xf32>, vector<32x32xf32> -> vector<32x32xf32>
    %c0_10 = arith.constant 0 : index
    %c0_11 = arith.constant 0 : index
    %20 = vector.load %arg6[%c0_10, %c0_11] : memref<32x32xf32, #tpu.memory_space<vmem>>, vector<32x32xf32>
    %21 = arith.mulf %20, %19 : vector<32x32xf32>
    %c0_12 = arith.constant 0 : index
    %c0_13 = arith.constant 0 : index
    %22 = vector.load %arg1[%c0_12, %c0_13] : memref<8x32xf32, #tpu.memory_space<vmem>>, vector<8x32xf32>
    %cst_14 = arith.constant dense<0.000000e+00> : vector<8x32xf32>
    %23 = tpu.matmul %22, %21, %cst_14 {dimension_numbers = #tpu.dot_dimension_numbers<[1], [0], [0], [1], [0, 0, 1, 1], [], []>} : vector<8x32xf32>, vector<32x32xf32>, vector<8x32xf32> -> vector<8x32xf32>
    %c0_15 = arith.constant 0 : index
    %c0_16 = arith.constant 0 : index
    %c0_17 = arith.constant 0 : index
    %24 = vector.load %arg2[%c0_15, %c0_16, %c0_17] : memref<3x32x256xf32, #tpu.memory_space<vmem>>, vector<1x32x256xf32>
    %25 = vector.shape_cast %24 : vector<1x32x256xf32> to vector<32x256xf32>
    %cst_18 = arith.constant dense<0.000000e+00> : vector<8x256xf32>
    %26 = tpu.matmul %22, %25, %cst_18 {dimension_numbers = #tpu.dot_dimension_numbers<[1], [0], [0], [1], [0, 0, 1, 1], [], []>} : vector<8x32xf32>, vector<32x256xf32>, vector<8x256xf32> -> vector<8x256xf32>
    %c1 = arith.constant 1 : index
    %c0_19 = arith.constant 0 : index
    %c0_20 = arith.constant 0 : index
    %27 = vector.load %arg2[%c1, %c0_19, %c0_20] : memref<3x32x256xf32, #tpu.memory_space<vmem>>, vector<1x32x256xf32>
    %28 = vector.shape_cast %27 : vector<1x32x256xf32> to vector<32x256xf32>
    %cst_21 = arith.constant dense<0.000000e+00> : vector<8x256xf32>
    %29 = tpu.matmul %23, %28, %cst_21 {dimension_numbers = #tpu.dot_dimension_numbers<[1], [0], [0], [1], [0, 0, 1, 1], [], []>} : vector<8x32xf32>, vector<32x256xf32>, vector<8x256xf32> -> vector<8x256xf32>
    %30 = arith.addf %26, %29 : vector<8x256xf32>
    %c0_22 = arith.constant 0 : index
    %c0_23 = arith.constant 0 : index
    %31 = vector.load %arg3[%c0_22, %c0_23] : memref<1x256xf32, #tpu.memory_space<vmem>>, vector<1x256xf32>
    %32 = vector.broadcast %31 : vector<1x256xf32> to vector<8x256xf32>
    %33 = arith.addf %30, %32 : vector<8x256xf32>
    %cst_24 = arith.constant dense<0.000000e+00> : vector<8x32xf32>
    %34 = tpu.matmul %23, %21, %cst_24 {dimension_numbers = #tpu.dot_dimension_numbers<[1], [0], [0], [1], [0, 0, 1, 1], [], []>} : vector<8x32xf32>, vector<32x32xf32>, vector<8x32xf32> -> vector<8x32xf32>
    %cst_25 = arith.constant 2.000000e+00 : f32
    %35 = vector.broadcast %cst_25 : f32 to vector<8x32xf32>
    %36 = arith.mulf %35, %34 : vector<8x32xf32>
    %37 = arith.subf %36, %22 : vector<8x32xf32>
    %c2 = arith.constant 2 : index
    %c0_26 = arith.constant 0 : index
    %c0_27 = arith.constant 0 : index
    %38 = vector.load %arg2[%c2, %c0_26, %c0_27] : memref<3x32x256xf32, #tpu.memory_space<vmem>>, vector<1x32x256xf32>
    %39 = vector.shape_cast %38 : vector<1x32x256xf32> to vector<32x256xf32>
    %cst_28 = arith.constant dense<0.000000e+00> : vector<8x256xf32>
    %40 = tpu.matmul %37, %39, %cst_28 {dimension_numbers = #tpu.dot_dimension_numbers<[1], [0], [0], [1], [0, 0, 1, 1], [], []>} : vector<8x32xf32>, vector<32x256xf32>, vector<8x256xf32> -> vector<8x256xf32>
    %41 = arith.addf %33, %40 : vector<8x256xf32>
    %c0_29 = arith.constant 0 : index
    %c0_30 = arith.constant 0 : index
    %42 = vector.load %arg7[%c0_29, %c0_30] : memref<8x256xf32, #tpu.memory_space<vmem>>, vector<8x256xf32>
    tpu.vector_store %arg7[%c0_29, %c0_30], %41 {strides = array<i32>} : memref<8x256xf32, #tpu.memory_space<vmem>>, vector<8x256xf32>,
    return
  }
}

</mosaic_0001>

<llo_original>
// kernel: gcn_forward.1
$region0: #{gcn_forward.1}
  #allocation0 [shape = 'u32[]', space=smem, size = 0x4, offset = 0x4, fixed_abs, tag = 'smem constant byte address 0x4 - core index']
  #allocation1 [shape = 'u32[144,128]{1,0:T(1,128)}', space=vmem, size = 0x12000, scoped, tag = 'internal scratch']
  %s0 = inlined_call_operand.vmem [shape: f32[8,16], index: 0, kind: input, shape index: {}]
  %s1 = inlined_call_operand.vmem [shape: f32[8,32], index: 1, kind: input, shape index: {}]
  %s2 = inlined_call_operand.hbm [shape: f32[3,32,256], index: 2, kind: input, shape index: {}]
  %s3 = inlined_call_operand.vmem [shape: f32[1,256], index: 3, kind: input, shape index: {}]
  %s4 = inlined_call_operand.vmem [shape: f32[32,8], index: 4, kind: input, shape index: {}]
  %s5 = inlined_call_operand.vmem [shape: f32[8,32], index: 5, kind: input, shape index: {}]
  %s6 = inlined_call_operand.vmem [shape: f32[32,32], index: 6, kind: input, shape index: {}]
  %s7 = inlined_call_operand.vmem [shape: f32[8,256], index: 7, kind: output, shape index: {}]
  %s8 = sld [smem:[#allocation0]]
  $region42: #{gcn_forward.1} parent=0
    _
  %s10 = ssub.s32 1, %s8
  %s11 = scalar_select 0, %s10, %s8
  $region1: #{gcn_forward.1} parent=0
    #allocation2 [shape = 'u8[98304]{0}', space=vmem, size = 0x18000, scoped, tag = 'input window, operand 2, single buffered']
    #allocation3 [shape = 's32[1]{0}', space=sflag, size = 0x4, scoped, tag = 'scoped memory for gcn_forward.1']
    %12 = vsyncpa [#allocation3], 0
    // Predicated region
    $region2: #{gcn_forward.1} parent=1 // pred_check
      _
    $region3: #{gcn_forward.1} parent=1 // pred_check_branch
      %14 = sbr.rel (0) target = $region5
    $region4: #{gcn_forward.1} parent=1 // pred_region
      _
    $region5: #{gcn_forward.1} parent=1 // pred_fallthru
      _
    // Predicated region
    $region6: #{gcn_forward.1} parent=1 // pred_check
      _
    $region7: #{gcn_forward.1} parent=1 // pred_check_branch
      %16 = sbr.rel (0) target = $region9
    $region8: #{gcn_forward.1} parent=1 // pred_region
      _
    $region9: #{gcn_forward.1} parent=1 // pred_fallthru
      _
    // Predicated region
    $region10: #{gcn_forward.1} parent=1 // pred_check
      _
    $region11: #{gcn_forward.1} parent=1 // pred_check_branch
      %18 = sbr.rel (0) target = $region13
    $region12: #{gcn_forward.1} parent=1 // pred_region
      %s20 = ssub.s32 3072, 3072
      %21 = vsyncadd [#allocation3], %s20
      %s22 = sshll.u32 [#allocation2], 4
      %s23 = int_to_ptr.vmem [resolvable:$true] %s22
      %28 = dma.hbm_to_vmem [thread:$0]  %s2, 3072, %s23, [#allocation3], 256, 256, 16
    $region13: #{gcn_forward.1} parent=1 // pred_fallthru
      _
    // Predicated region
    $region14: #{gcn_forward.1} parent=1 // pred_check
      _
    $region15: #{gcn_forward.1} parent=1 // pred_check_branch
      %30 = sbr.rel (0) target = $region17
    $region16: #{gcn_forward.1} parent=1 // pred_region
      _
    $region17: #{gcn_forward.1} parent=1 // pred_fallthru
      _
    // Predicated region
    $region18: #{gcn_forward.1} parent=1 // pred_check
      _
    $region19: #{gcn_forward.1} parent=1 // pred_check_branch
      %32 = sbr.rel (0) target = $region21
    $region20: #{gcn_forward.1} parent=1 // pred_region
      _
    $region21: #{gcn_forward.1} parent=1 // pred_fallthru
      _
    // Predicated region
    $region22: #{gcn_forward.1} parent=1 // pred_check
      _
    $region23: #{gcn_forward.1} parent=1 // pred_check_branch
      %34 = sbr.rel (0) target = $region25
    $region24: #{gcn_forward.1} parent=1 // pred_region
      _
    $region25: #{gcn_forward.1} parent=1 // pred_fallthru
      _
    // Predicated region
    $region26: #{gcn_forward.1} parent=1 // pred_check
      _
    $region27: #{gcn_forward.1} parent=1 // pred_check_branch
      %36 = sbr.rel (0) target = $region29
    $region28: #{gcn_forward.1} parent=1 // pred_region
      _
    $region29: #{gcn_forward.1} parent=1 // pred_fallthru
      _
    // Predicated region
    $region30: #{gcn_forward.1} parent=1 // pred_check
      _
    $region31: #{gcn_forward.1} parent=1 // pred_check_branch
      %38 = sbr.rel (0) target = $region33
    $region32: #{gcn_forward.1} parent=1 // pred_region
      %39 = dma.done [#allocation3], 3072
    $region33: #{gcn_forward.1} parent=1 // pred_fallthru
      _
    %v40 = vld [vmem:[%s0] sm:$0xff]
    %vm41 = vcmask 130048
    %v43 = vsel %vm41, %v40, 0
    %45 = vmatprep.subr.mxu0 0.0
    %46 = vmatpush1.xpose.msra.mxu0 0.0
    %47 = vmatprep.subr.mxu0 0.0
    %48 = vmatpush1.xpose.msra.mxu0 0.0
    %49 = vmatprep.subr.mxu0 0.0
    %50 = vmatpush1.xpose.msra.mxu0 0.0
    %51 = vmatprep.subr.mxu0 0.0
    %52 = vmatpush1.xpose.msra.mxu0 0.0
    %53 = vmatprep.subr.mxu0 0.0
    %54 = vmatpush1.xpose.msra.mxu0 0.0
    %55 = vmatprep.subr.mxu0 0.0
    %56 = vmatpush1.xpose.msra.mxu0 0.0
    %57 = vmatprep.subr.mxu0 0.0
    %58 = vmatpush1.xpose.msra.mxu0 0.0
    %59 = vmatprep.subr.mxu0 0.0
    %60 = vmatpush1.xpose.msra.mxu0 0.0
    %61 = vmatprep.subr.mxu0 0.0
    %62 = vmatpush1.xpose.msra.mxu0 0.0
    %63 = vmatprep.subr.mxu0 0.0
    %64 = vmatpush1.xpose.msra.mxu0 0.0
    %65 = vmatprep.subr.mxu0 0.0
    %66 = vmatpush1.xpose.msra.mxu0 0.0
    %67 = vmatprep.subr.mxu0 0.0
    %68 = vmatpush1.xpose.msra.mxu0 0.0
    %69 = vmatprep.subr.mxu0 0.0
    %70 = vmatpush1.xpose.msra.mxu0 0.0
    %71 = vmatprep.subr.mxu0 0.0
    %72 = vmatpush1.xpose.msra.mxu0 0.0
    %73 = vmatprep.subr.mxu0 0.0
    %74 = vmatpush1.xpose.msra.mxu0 0.0
    %75 = vmatprep.subr.mxu0 0.0
    %76 = vmatpush1.xpose.msra.mxu0 %v43
    %77 = vmatprep.subr.mxu0 0.0
    %78 = vmatpush2.xpose.msra.mxu0 0.0
    %79 = vmatprep.subr.mxu0 0.0
    %80 = vmatpush2.xpose.msra.mxu0 0.0
    %81 = vmatprep.subr.mxu0 0.0
    %82 = vmatpush2.xpose.msra.mxu0 0.0
    %83 = vmatprep.subr.mxu0 0.0
    %84 = vmatpush2.xpose.msra.mxu0 0.0
    %85 = vmatprep.subr.mxu0 0.0
    %86 = vmatpush2.xpose.msra.mxu0 0.0
    %87 = vmatprep.subr.mxu0 0.0
    %88 = vmatpush2.xpose.msra.mxu0 0.0
    %89 = vmatprep.subr.mxu0 0.0
    %90 = vmatpush2.xpose.msra.mxu0 0.0
    %91 = vmatprep.subr.mxu0 0.0
    %92 = vmatpush2.xpose.msra.mxu0 0.0
    %93 = vmatprep.subr.mxu0 0.0
    %94 = vmatpush2.xpose.msra.mxu0 0.0
    %95 = vmatprep.subr.mxu0 0.0
    %96 = vmatpush2.xpose.msra.mxu0 0.0
    %97 = vmatprep.subr.mxu0 0.0
    %98 = vmatpush2.xpose.msra.mxu0 0.0
    %99 = vmatprep.subr.mxu0 0.0
    %100 = vmatpush2.xpose.msra.mxu0 0.0
    %101 = vmatprep.subr.mxu0 0.0
    %102 = vmatpush2.xpose.msra.mxu0 0.0
    %103 = vmatprep.subr.mxu0 0.0
    %104 = vmatpush2.xpose.msra.mxu0 0.0
    %105 = vmatprep.subr.mxu0 0.0
    %106 = vmatpush2.xpose.msra.mxu0 0.0
    %107 = vmatprep.subr.mxu0 0.0
    %108 = vmatpush2.xpose.msra.mxu0 0.0
    %109 = vmatprep.mubr.f32.mxu0 0.0
    %110 = vmatmul.mubr.f32.gmra.mxu0 %v43
    %v111 = vpop.f32.mrf.mxu0
    %v112 = vadd.f32 0.0, %v111
    %v113 = vpop.f32.mrf.mxu0
    %114 = vdwg.mxu0
    %v115 = vmax.f32 %v112, 0.0
    %vm116 = vcmask 64512
    %v117 = vsel %vm116, %v115, -inf
    %118 = vmax.xlane.f32.xlu0 %v117
    %v119 = vpop.xlane.xlu0 %118
    %v120 = vsub.f32 %v115, %v119
    %v121 = vmul.f32 %v120, 1.442695
    %v122 = vpow.pop %v121
    %v123 = vsel %vm116, %v122, 0.0
    %124 = vadd.xlane.f32.xlu0 %v123
    %v125 = vpop.xlane.xlu0 %124
    %v126 = vrcp.pop %v125
    %v127 = vmul.f32 %v122, %v126
    %v128 = vld [vmem:[%s4] sm:$0xff]
    %v129 = vld [vmem:[%s4 + $0x8] sm:$0xff]
    %v130 = vld [vmem:[%s4 + $0x10] sm:$0xff]
    %v131 = vld [vmem:[%s4 + $0x18] sm:$0xff]
    %v133 = vsel %vm116, %v128, 0
    %v136 = vsel %vm116, %v129, 0
    %v139 = vsel %vm116, %v130, 0
    %v142 = vsel %vm116, %v131, 0
    %v145 = vsel %vm116, %v127, 0
    %147 = vmatprep.subr.mxu0 0.0
    %148 = vmatpush1.xpose.msra.mxu0 0.0
    %149 = vmatprep.subr.mxu0 0.0
    %150 = vmatpush1.xpose.msra.mxu0 0.0
    %151 = vmatprep.subr.mxu0 0.0
    %152 = vmatpush1.xpose.msra.mxu0 0.0
    %153 = vmatprep.subr.mxu0 0.0
    %154 = vmatpush1.xpose.msra.mxu0 0.0
    %155 = vmatprep.subr.mxu0 0.0
    %156 = vmatpush1.xpose.msra.mxu0 0.0
    %157 = vmatprep.subr.mxu0 0.0
    %158 = vmatpush1.xpose.msra.mxu0 0.0
    %159 = vmatprep.subr.mxu0 0.0
    %160 = vmatpush1.xpose.msra.mxu0 0.0
    %161 = vmatprep.subr.mxu0 0.0
    %162 = vmatpush1.xpose.msra.mxu0 0.0
    %163 = vmatprep.subr.mxu0 0.0
    %164 = vmatpush1.xpose.msra.mxu0 0.0
    %165 = vmatprep.subr.mxu0 0.0
    %166 = vmatpush1.xpose.msra.mxu0 0.0
    %167 = vmatprep.subr.mxu0 0.0
    %168 = vmatpush1.xpose.msra.mxu0 0.0
    %169 = vmatprep.subr.mxu0 0.0
    %170 = vmatpush1.xpose.msra.mxu0 0.0
    %171 = vmatprep.subr.mxu0 0.0
    %172 = vmatpush1.xpose.msra.mxu0 0.0
    %173 = vmatprep.subr.mxu0 0.0
    %174 = vmatpush1.xpose.msra.mxu0 0.0
    %175 = vmatprep.subr.mxu0 0.0
    %176 = vmatpush1.xpose.msra.mxu0 0.0
    %177 = vmatprep.subr.mxu0 0.0
    %178 = vmatpush1.xpose.msra.mxu0 %v145
    %179 = vmatprep.subr.mxu0 0.0
    %180 = vmatpush2.xpose.msra.mxu0 0.0
    %181 = vmatprep.subr.mxu0 0.0
    %182 = vmatpush2.xpose.msra.mxu0 0.0
    %183 = vmatprep.subr.mxu0 0.0
    %184 = vmatpush2.xpose.msra.mxu0 0.0
    %185 = vmatprep.subr.mxu0 0.0
    %186 = vmatpush2.xpose.msra.mxu0 0.0
    %187 = vmatprep.subr.mxu0 0.0
    %188 = vmatpush2.xpose.msra.mxu0 0.0
    %189 = vmatprep.subr.mxu0 0.0
    %190 = vmatpush2.xpose.msra.mxu0 0.0
    %191 = vmatprep.subr.mxu0 0.0
    %192 = vmatpush2.xpose.msra.mxu0 0.0
    %193 = vmatprep.subr.mxu0 0.0
    %194 = vmatpush2.xpose.msra.mxu0 0.0
    %195 = vmatprep.subr.mxu0 0.0
    %196 = vmatpush2.xpose.msra.mxu0 0.0
    %197 = vmatprep.subr.mxu0 0.0
    %198 = vmatpush2.xpose.msra.mxu0 0.0
    %199 = vmatprep.subr.mxu0 0.0
    %200 = vmatpush2.xpose.msra.mxu0 0.0
    %201 = vmatprep.subr.mxu0 0.0
    %202 = vmatpush2.xpose.msra.mxu0 0.0
    %203 = vmatprep.subr.mxu0 0.0
    %204 = vmatpush2.xpose.msra.mxu0 0.0
    %205 = vmatprep.subr.mxu0 0.0
    %206 = vmatpush2.xpose.msra.mxu0 0.0
    %207 = vmatprep.subr.mxu0 0.0
    %208 = vmatpush2.xpose.msra.mxu0 0.0
    %209 = vmatprep.subr.mxu0 0.0
    %210 = vmatpush2.xpose.msra.mxu0 0.0
    %211 = vmatprep.mubr.f32.mxu0 0.0
    %212 = vmatmul.mubr.f32.gmra.mxu0 %v133
    %v213 = vpop.f32.mrf.mxu0
    %v214 = vadd.f32 0.0, %v213
    %v215 = vpop.f32.mrf.mxu0
    %216 = vmatprep.mubr.f32.mxu0 0.0
    %217 = vmatmul.mubr.f32.gmra.mxu0 %v136
    %v218 = vpop.f32.mrf.mxu0
    %v219 = vadd.f32 0.0, %v218
    %v220 = vpop.f32.mrf.mxu0
    %221 = vmatprep.mubr.f32.mxu0 0.0
    %222 = vmatmul.mubr.f32.gmra.mxu0 %v139
    %v223 = vpop.f32.mrf.mxu0
    %v224 = vadd.f32 0.0, %v223
    %v225 = vpop.f32.mrf.mxu0
    %226 = vmatprep.mubr.f32.mxu0 0.0
    %227 = vmatmul.mubr.f32.gmra.mxu0 %v142
    %v228 = vpop.f32.mrf.mxu0
    %v229 = vadd.f32 0.0, %v228
    %v230 = vpop.f32.mrf.mxu0
    %231 = vdwg.mxu0
    %v232 = vld [vmem:[%s5] sm:$0xff]
    %v234 = vsel %vm116, %v214, 0
    %v237 = vsel %vm116, %v219, 0
    %v240 = vsel %vm116, %v224, 0
    %v243 = vsel %vm116, %v229, 0
    %245 = vmatprep.subr.mxu0 0.0
    %246 = vmatpush1.msra.mxu0 0.0
    %247 = vmatprep.subr.mxu0 0.0
    %248 = vmatpush1.msra.mxu0 0.0
    %249 = vmatprep.subr.mxu0 0.0
    %250 = vmatpush1.msra.mxu0 0.0
    %251 = vmatprep.subr.mxu0 0.0
    %252 = vmatpush1.msra.mxu0 0.0
    %253 = vmatprep.subr.mxu0 0.0
    %254 = vmatpush1.msra.mxu0 0.0
    %255 = vmatprep.subr.mxu0 0.0
    %256 = vmatpush1.msra.mxu0 0.0
    %257 = vmatprep.subr.mxu0 0.0
    %258 = vmatpush1.msra.mxu0 0.0
    %259 = vmatprep.subr.mxu0 0.0
    %260 = vmatpush1.msra.mxu0 0.0
    %261 = vmatprep.subr.mxu0 0.0
    %262 = vmatpush1.msra.mxu0 0.0
    %263 = vmatprep.subr.mxu0 0.0
    %264 = vmatpush1.msra.mxu0 0.0
    %265 = vmatprep.subr.mxu0 0.0
    %266 = vmatpush1.msra.mxu0 0.0
    %267 = vmatprep.subr.mxu0 0.0
    %268 = vmatpush1.msra.mxu0 0.0
    %269 = vmatprep.subr.mxu0 0.0
    %270 = vmatpush1.msra.mxu0 0.0
    %271 = vmatprep.subr.mxu0 0.0
    %272 = vmatpush1.msra.mxu0 0.0
    %273 = vmatprep.subr.mxu0 0.0
    %274 = vmatpush1.msra.mxu0 0.0
    %275 = vmatprep.subr.mxu0 0.0
    %276 = vmatpush1.msra.mxu0 %v232
    %277 = vmatprep.subr.mxu0 0.0
    %278 = vmatpush2.msra.mxu0 0.0
    %279 = vmatprep.subr.mxu0 0.0
    %280 = vmatpush2.msra.mxu0 0.0
    %281 = vmatprep.subr.mxu0 0.0
    %282 = vmatpush2.msra.mxu0 0.0
    %283 = vmatprep.subr.mxu0 0.0
    %284 = vmatpush2.msra.mxu0 0.0
    %285 = vmatprep.subr.mxu0 0.0
    %286 = vmatpush2.msra.mxu0 0.0
    %287 = vmatprep.subr.mxu0 0.0
    %288 = vmatpush2.msra.mxu0 0.0
    %289 = vmatprep.subr.mxu0 0.0
    %290 = vmatpush2.msra.mxu0 0.0
    %291 = vmatprep.subr.mxu0 0.0
    %292 = vmatpush2.msra.mxu0 0.0
    %293 = vmatprep.subr.mxu0 0.0
    %294 = vmatpush2.msra.mxu0 0.0
    %295 = vmatprep.subr.mxu0 0.0
    %296 = vmatpush2.msra.mxu0 0.0
    %297 = vmatprep.subr.mxu0 0.0
    %298 = vmatpush2.msra.mxu0 0.0
    %299 = vmatprep.subr.mxu0 0.0
    %300 = vmatpush2.msra.mxu0 0.0
    %301 = vmatprep.subr.mxu0 0.0
    %302 = vmatpush2.msra.mxu0 0.0
    %303 = vmatprep.subr.mxu0 0.0
    %304 = vmatpush2.msra.mxu0 0.0
    %305 = vmatprep.subr.mxu0 0.0
    %306 = vmatpush2.msra.mxu0 0.0
    %307 = vmatprep.subr.mxu0 0.0
    %308 = vmatpush2.msra.mxu0 0.0
    %309 = vmatprep.mubr.f32.mxu0 0.0
    %310 = vmatmul.mubr.f32.gmra.mxu0 %v234
    %v311 = vpop.f32.mrf.mxu0
    %v312 = vadd.f32 0.0, %v311
    %v313 = vpop.f32.mrf.mxu0
    %314 = vmatprep.mubr.f32.mxu0 0.0
    %315 = vmatmul.mubr.f32.gmra.mxu0 %v237
    %v316 = vpop.f32.mrf.mxu0
    %v317 = vadd.f32 0.0, %v316
    %v318 = vpop.f32.mrf.mxu0
    %319 = vmatprep.mubr.f32.mxu0 0.0
    %320 = vmatmul.mubr.f32.gmra.mxu0 %v240
    %v321 = vpop.f32.mrf.mxu0
    %v322 = vadd.f32 0.0, %v321
    %v323 = vpop.f32.mrf.mxu0
    %324 = vmatprep.mubr.f32.mxu0 0.0
    %325 = vmatmul.mubr.f32.gmra.mxu0 %v243
    %v326 = vpop.f32.mrf.mxu0
    %v327 = vadd.f32 0.0, %v326
    %v328 = vpop.f32.mrf.mxu0
    %329 = vdwg.mxu0
    %v330 = vld [vmem:[%s6] sm:$0xff]
    %v331 = vld [vmem:[%s6 + $0x8] sm:$0xff]
    %v332 = vld [vmem:[%s6 + $0x10] sm:$0xff]
    %v333 = vld [vmem:[%s6 + $0x18] sm:$0xff]
    %v334 = vmul.f32 %v330, %v312
    %v335 = vmul.f32 %v331, %v317
    %v336 = vmul.f32 %v332, %v322
    %v337 = vmul.f32 %v333, %v327
    %v338 = vld [vmem:[%s1] sm:$0xff]
    %vm339 = vcmask 261120
    %v341 = vsel %vm339, %v338, 0
    %343 = vmatprep.subr.mxu0 0.0
    %344 = vmatpush1.msra.mxu0 0.0
    %345 = vmatprep.subr.mxu0 0.0
    %346 = vmatpush1.msra.mxu0 0.0
    %347 = vmatprep.subr.mxu0 0.0
    %348 = vmatpush1.msra.mxu0 0.0
    %349 = vmatprep.subr.mxu0 0.0
    %350 = vmatpush1.msra.mxu0 0.0
    %351 = vmatprep.subr.mxu0 0.0
    %352 = vmatpush1.msra.mxu0 0.0
    %353 = vmatprep.subr.mxu0 0.0
    %354 = vmatpush1.msra.mxu0 0.0
    %355 = vmatprep.subr.mxu0 0.0
    %356 = vmatpush1.msra.mxu0 0.0
    %357 = vmatprep.subr.mxu0 0.0
    %358 = vmatpush1.msra.mxu0 0.0
    %359 = vmatprep.subr.mxu0 0.0
    %360 = vmatpush1.msra.mxu0 0.0
    %361 = vmatprep.subr.mxu0 0.0
    %362 = vmatpush1.msra.mxu0 0.0
    %363 = vmatprep.subr.mxu0 0.0
    %364 = vmatpush1.msra.mxu0 0.0
    %365 = vmatprep.subr.mxu0 0.0
    %366 = vmatpush1.msra.mxu0 0.0
    %367 = vmatprep.subr.mxu0 0.0
    %368 = vmatpush1.msra.mxu0 %v337
    %369 = vmatprep.subr.mxu0 0.0
    %370 = vmatpush1.msra.mxu0 %v336
    %371 = vmatprep.subr.mxu0 0.0
    %372 = vmatpush1.msra.mxu0 %v335
    %373 = vmatprep.subr.mxu0 0.0
    %374 = vmatpush1.msra.mxu0 %v334
    %375 = vmatprep.subr.mxu0 0.0
    %376 = vmatpush2.msra.mxu0 0.0
    %377 = vmatprep.subr.mxu0 0.0
    %378 = vmatpush2.msra.mxu0 0.0
    %379 = vmatprep.subr.mxu0 0.0
    %380 = vmatpush2.msra.mxu0 0.0
    %381 = vmatprep.subr.mxu0 0.0
    %382 = vmatpush2.msra.mxu0 0.0
    %383 = vmatprep.subr.mxu0 0.0
    %384 = vmatpush2.msra.mxu0 0.0
    %385 = vmatprep.subr.mxu0 0.0
    %386 = vmatpush2.msra.mxu0 0.0
    %387 = vmatprep.subr.mxu0 0.0
    %388 = vmatpush2.msra.mxu0 0.0
    %389 = vmatprep.subr.mxu0 0.0
    %390 = vmatpush2.msra.mxu0 0.0
    %391 = vmatprep.subr.mxu0 0.0
    %392 = vmatpush2.msra.mxu0 0.0
    %393 = vmatprep.subr.mxu0 0.0
    %394 = vmatpush2.msra.mxu0 0.0
    %395 = vmatprep.subr.mxu0 0.0
    %396 = vmatpush2.msra.mxu0 0.0
    %397 = vmatprep.subr.mxu0 0.0
    %398 = vmatpush2.msra.mxu0 0.0
    %399 = vmatprep.subr.mxu0 0.0
    %400 = vmatpush2.msra.mxu0 0.0
    %401 = vmatprep.subr.mxu0 0.0
    %402 = vmatpush2.msra.mxu0 0.0
    %403 = vmatprep.subr.mxu0 0.0
    %404 = vmatpush2.msra.mxu0 0.0
    %405 = vmatprep.subr.mxu0 0.0
    %406 = vmatpush2.msra.mxu0 0.0
    %407 = vmatprep.mubr.f32.mxu0 0.0
    %408 = vmatmul.mubr.f32.gmra.mxu0 %v341
    %v409 = vpop.f32.mrf.mxu0
    %v410 = vadd.f32 0.0, %v409
    %v411 = vpop.f32.mrf.mxu0
    %412 = vdwg.mxu0
    %v413 = vld [vmem:[#allocation2] sm:$0xff]
    %v414 = vld [vmem:[#allocation2 + $0x8] sm:$0xff]
    %v415 = vld [vmem:[#allocation2 + $0x10] sm:$0xff]
    %v416 = vld [vmem:[#allocation2 + $0x18] sm:$0xff]
    %v417 = vld [vmem:[#allocation2 + $0x20] sm:$0xff]
    %v418 = vld [vmem:[#allocation2 + $0x28] sm:$0xff]
    %v419 = vld [vmem:[#allocation2 + $0x30] sm:$0xff]
    %v420 = vld [vmem:[#allocation2 + $0x38] sm:$0xff]
    %s421 = scalar_lea.vmem [#allocation2], 64
    %v422 = vld [vmem:[%s421] sm:$0xff]
    %v423 = vld [vmem:[%s421 + $0x8] sm:$0xff]
    %v424 = vld [vmem:[%s421 + $0x10] sm:$0xff]
    %v425 = vld [vmem:[%s421 + $0x18] sm:$0xff]
    %v426 = vld [vmem:[%s421 + $0x20] sm:$0xff]
    %v427 = vld [vmem:[%s421 + $0x28] sm:$0xff]
    %v428 = vld [vmem:[%s421 + $0x30] sm:$0xff]
    %v429 = vld [vmem:[%s421 + $0x38] sm:$0xff]
    %v431 = vsel %vm339, %v410, 0
    %433 = vmatprep.subr.mxu0 0.0
    %434 = vmatpush1.msra.mxu0 0.0
    %435 = vmatprep.subr.mxu0 0.0
    %436 = vmatpush1.msra.mxu0 0.0
    %437 = vmatprep.subr.mxu0 0.0
    %438 = vmatpush1.msra.mxu0 0.0
    %439 = vmatprep.subr.mxu0 0.0
    %440 = vmatpush1.msra.mxu0 0.0
    %441 = vmatprep.subr.mxu0 0.0
    %442 = vmatpush1.msra.mxu0 0.0
    %443 = vmatprep.subr.mxu0 0.0
    %444 = vmatpush1.msra.mxu0 0.0
    %445 = vmatprep.subr.mxu0 0.0
    %446 = vmatpush1.msra.mxu0 0.0
    %447 = vmatprep.subr.mxu0 0.0
    %448 = vmatpush1.msra.mxu0 0.0
    %449 = vmatprep.subr.mxu0 0.0
    %450 = vmatpush1.msra.mxu0 0.0
    %451 = vmatprep.subr.mxu0 0.0
    %452 = vmatpush1.msra.mxu0 0.0
    %453 = vmatprep.subr.mxu0 0.0
    %454 = vmatpush1.msra.mxu0 0.0
    %455 = vmatprep.subr.mxu0 0.0
    %456 = vmatpush1.msra.mxu0 0.0
    %457 = vmatprep.subr.mxu0 %v429
    %458 = vmatpush1.msra.mxu0 %v428
    %459 = vmatprep.subr.mxu0 %v427
    %460 = vmatpush1.msra.mxu0 %v426
    %461 = vmatprep.subr.mxu0 %v425
    %462 = vmatpush1.msra.mxu0 %v424
    %463 = vmatprep.subr.mxu0 %v423
    %464 = vmatpush1.msra.mxu0 %v422
    %465 = vmatprep.subr.mxu0 0.0
    %466 = vmatpush2.msra.mxu0 0.0
    %467 = vmatprep.subr.mxu0 0.0
    %468 = vmatpush2.msra.mxu0 0.0
    %469 = vmatprep.subr.mxu0 0.0
    %470 = vmatpush2.msra.mxu0 0.0
    %471 = vmatprep.subr.mxu0 0.0
    %472 = vmatpush2.msra.mxu0 0.0
    %473 = vmatprep.subr.mxu0 0.0
    %474 = vmatpush2.msra.mxu0 0.0
    %475 = vmatprep.subr.mxu0 0.0
    %476 = vmatpush2.msra.mxu0 0.0
    %477 = vmatprep.subr.mxu0 0.0
    %478 = vmatpush2.msra.mxu0 0.0
    %479 = vmatprep.subr.mxu0 0.0
    %480 = vmatpush2.msra.mxu0 0.0
    %481 = vmatprep.subr.mxu0 0.0
    %482 = vmatpush2.msra.mxu0 0.0
    %483 = vmatprep.subr.mxu0 0.0
    %484 = vmatpush2.msra.mxu0 0.0
    %485 = vmatprep.subr.mxu0 0.0
    %486 = vmatpush2.msra.mxu0 0.0
    %487 = vmatprep.subr.mxu0 0.0
    %488 = vmatpush2.msra.mxu0 0.0
    %489 = vmatprep.subr.mxu0 0.0
    %490 = vmatpush2.msra.mxu0 0.0
    %491 = vmatprep.subr.mxu0 0.0
    %492 = vmatpush2.msra.mxu0 0.0
    %493 = vmatprep.subr.mxu0 0.0
    %494 = vmatpush2.msra.mxu0 0.0
    %495 = vmatprep.subr.mxu0 0.0
    %496 = vmatpush2.msra.mxu0 0.0
    %497 = vmatprep.mubr.f32.mxu0 0.0
    %498 = vmatmul.mubr.f32.gmra.mxu0 %v431
    %v499 = vpop.f32.mrf.mxu0
    %v500 = vadd.f32 0.0, %v499
    %v501 = vpop.f32.mrf.mxu0
    %v502 = vadd.f32 0.0, %v501
    %503 = vdwg.mxu0
    %504 = vmatprep.subr.mxu0 0.0
    %505 = vmatpush1.msra.mxu0 0.0
    %506 = vmatprep.subr.mxu0 0.0
    %507 = vmatpush1.msra.mxu0 0.0
    %508 = vmatprep.subr.mxu0 0.0
    %509 = vmatpush1.msra.mxu0 0.0
    %510 = vmatprep.subr.mxu0 0.0
    %511 = vmatpush1.msra.mxu0 0.0
    %512 = vmatprep.subr.mxu0 0.0
    %513 = vmatpush1.msra.mxu0 0.0
    %514 = vmatprep.subr.mxu0 0.0
    %515 = vmatpush1.msra.mxu0 0.0
    %516 = vmatprep.subr.mxu0 0.0
    %517 = vmatpush1.msra.mxu0 0.0
    %518 = vmatprep.subr.mxu0 0.0
    %519 = vmatpush1.msra.mxu0 0.0
    %520 = vmatprep.subr.mxu0 0.0
    %521 = vmatpush1.msra.mxu0 0.0
    %522 = vmatprep.subr.mxu0 0.0
    %523 = vmatpush1.msra.mxu0 0.0
    %524 = vmatprep.subr.mxu0 0.0
    %525 = vmatpush1.msra.mxu0 0.0
    %526 = vmatprep.subr.mxu0 0.0
    %527 = vmatpush1.msra.mxu0 0.0
    %528 = vmatprep.subr.mxu0 %v420
    %529 = vmatpush1.msra.mxu0 %v419
    %530 = vmatprep.subr.mxu0 %v418
    %531 = vmatpush1.msra.mxu0 %v417
    %532 = vmatprep.subr.mxu0 %v416
    %533 = vmatpush1.msra.mxu0 %v415
    %534 = vmatprep.subr.mxu0 %v414
    %535 = vmatpush1.msra.mxu0 %v413
    %536 = vmatprep.subr.mxu0 0.0
    %537 = vmatpush2.msra.mxu0 0.0
    %538 = vmatprep.subr.mxu0 0.0
    %539 = vmatpush2.msra.mxu0 0.0
    %540 = vmatprep.subr.mxu0 0.0
    %541 = vmatpush2.msra.mxu0 0.0
    %542 = vmatprep.subr.mxu0 0.0
    %543 = vmatpush2.msra.mxu0 0.0
    %544 = vmatprep.subr.mxu0 0.0
    %545 = vmatpush2.msra.mxu0 0.0
    %546 = vmatprep.subr.mxu0 0.0
    %547 = vmatpush2.msra.mxu0 0.0
    %548 = vmatprep.subr.mxu0 0.0
    %549 = vmatpush2.msra.mxu0 0.0
    %550 = vmatprep.subr.mxu0 0.0
    %551 = vmatpush2.msra.mxu0 0.0
    %552 = vmatprep.subr.mxu0 0.0
    %553 = vmatpush2.msra.mxu0 0.0
    %554 = vmatprep.subr.mxu0 0.0
    %555 = vmatpush2.msra.mxu0 0.0
    %556 = vmatprep.subr.mxu0 0.0
    %557 = vmatpush2.msra.mxu0 0.0
    %558 = vmatprep.subr.mxu0 0.0
    %559 = vmatpush2.msra.mxu0 0.0
    %560 = vmatprep.subr.mxu0 0.0
    %561 = vmatpush2.msra.mxu0 0.0
    %562 = vmatprep.subr.mxu0 0.0
    %563 = vmatpush2.msra.mxu0 0.0
    %564 = vmatprep.subr.mxu0 0.0
    %565 = vmatpush2.msra.mxu0 0.0
    %566 = vmatprep.subr.mxu0 0.0
    %567 = vmatpush2.msra.mxu0 0.0
    %568 = vmatprep.mubr.f32.mxu0 0.0
    %569 = vmatmul.mubr.f32.gmra.mxu0 %v341
    %v570 = vpop.f32.mrf.mxu0
    %v571 = vadd.f32 %v500, %v570
    %v572 = vpop.f32.mrf.mxu0
    %v573 = vadd.f32 %v502, %v572
    %574 = vdwg.mxu0
    %v575 = vld [vmem:[%s3] sm:$0x3]
    %v577 = vlaneseq
    %v578 = vshrl.u32 %v577, 7
    %v579 = vsub.s32 0, %v578
    %v580 = vrot.slane %v575, %v579
    %v581 = vlaneseq
    %v582 = vshrl.u32 %v581, 7
    %v583 = vsub.s32 1, %v582
    %v584 = vrot.slane %v575, %v583
    %v587 = vadd.f32 %v571, %v580
    %v588 = vadd.f32 %v573, %v584
    %589 = vmatprep.subr.mxu0 0.0
    %590 = vmatpush1.msra.mxu0 0.0
    %591 = vmatprep.subr.mxu0 0.0
    %592 = vmatpush1.msra.mxu0 0.0
    %593 = vmatprep.subr.mxu0 0.0
    %594 = vmatpush1.msra.mxu0 0.0
    %595 = vmatprep.subr.mxu0 0.0
    %596 = vmatpush1.msra.mxu0 0.0
    %597 = vmatprep.subr.mxu0 0.0
    %598 = vmatpush1.msra.mxu0 0.0
    %599 = vmatprep.subr.mxu0 0.0
    %600 = vmatpush1.msra.mxu0 0.0
    %601 = vmatprep.subr.mxu0 0.0
    %602 = vmatpush1.msra.mxu0 0.0
    %603 = vmatprep.subr.mxu0 0.0
    %604 = vmatpush1.msra.mxu0 0.0
    %605 = vmatprep.subr.mxu0 0.0
    %606 = vmatpush1.msra.mxu0 0.0
    %607 = vmatprep.subr.mxu0 0.0
    %608 = vmatpush1.msra.mxu0 0.0
    %609 = vmatprep.subr.mxu0 0.0
    %610 = vmatpush1.msra.mxu0 0.0
    %611 = vmatprep.subr.mxu0 0.0
    %612 = vmatpush1.msra.mxu0 0.0
    %613 = vmatprep.subr.mxu0 0.0
    %614 = vmatpush1.msra.mxu0 %v337
    %615 = vmatprep.subr.mxu0 0.0
    %616 = vmatpush1.msra.mxu0 %v336
    %617 = vmatprep.subr.mxu0 0.0
    %618 = vmatpush1.msra.mxu0 %v335
    %619 = vmatprep.subr.mxu0 0.0
    %620 = vmatpush1.msra.mxu0 %v334
    %621 = vmatprep.subr.mxu0 0.0
    %622 = vmatpush2.msra.mxu0 0.0
    %623 = vmatprep.subr.mxu0 0.0
    %624 = vmatpush2.msra.mxu0 0.0
    %625 = vmatprep.subr.mxu0 0.0
    %626 = vmatpush2.msra.mxu0 0.0
    %627 = vmatprep.subr.mxu0 0.0
    %628 = vmatpush2.msra.mxu0 0.0
    %629 = vmatprep.subr.mxu0 0.0
    %630 = vmatpush2.msra.mxu0 0.0
    %631 = vmatprep.subr.mxu0 0.0
    %632 = vmatpush2.msra.mxu0 0.0
    %633 = vmatprep.subr.mxu0 0.0
    %634 = vmatpush2.msra.mxu0 0.0
    %635 = vmatprep.subr.mxu0 0.0
    %636 = vmatpush2.msra.mxu0 0.0
    %637 = vmatprep.subr.mxu0 0.0
    %638 = vmatpush2.msra.mxu0 0.0
    %639 = vmatprep.subr.mxu0 0.0
    %640 = vmatpush2.msra.mxu0 0.0
    %641 = vmatprep.subr.mxu0 0.0
    %642 = vmatpush2.msra.mxu0 0.0
    %643 = vmatprep.subr.mxu0 0.0
    %644 = vmatpush2.msra.mxu0 0.0
    %645 = vmatprep.subr.mxu0 0.0
    %646 = vmatpush2.msra.mxu0 0.0
    %647 = vmatprep.subr.mxu0 0.0
    %648 = vmatpush2.msra.mxu0 0.0
    %649 = vmatprep.subr.mxu0 0.0
    %650 = vmatpush2.msra.mxu0 0.0
    %651 = vmatprep.subr.mxu0 0.0
    %652 = vmatpush2.msra.mxu0 0.0
    %653 = vmatprep.mubr.f32.mxu0 0.0
    %654 = vmatmul.mubr.f32.gmra.mxu0 %v431
    %v655 = vpop.f32.mrf.mxu0
    %v656 = vadd.f32 0.0, %v655
    %v657 = vpop.f32.mrf.mxu0
    %658 = vdwg.mxu0
    %v659 = vmul.f32 %v656, 2.0
    %v660 = vsub.f32 %v659, %v338
    %s661 = scalar_lea.vmem [#allocation2], 128
    %v662 = vld [vmem:[%s661] sm:$0xff]
    %v663 = vld [vmem:[%s661 + $0x8] sm:$0xff]
    %v664 = vld [vmem:[%s661 + $0x10] sm:$0xff]
    %v665 = vld [vmem:[%s661 + $0x18] sm:$0xff]
    %v666 = vld [vmem:[%s661 + $0x20] sm:$0xff]
    %v667 = vld [vmem:[%s661 + $0x28] sm:$0xff]
    %v668 = vld [vmem:[%s661 + $0x30] sm:$0xff]
    %v669 = vld [vmem:[%s661 + $0x38] sm:$0xff]
    %v671 = vsel %vm339, %v660, 0
    %673 = vmatprep.subr.mxu0 0.0
    %674 = vmatpush1.msra.mxu0 0.0
    %675 = vmatprep.subr.mxu0 0.0
    %676 = vmatpush1.msra.mxu0 0.0
    %677 = vmatprep.subr.mxu0 0.0
    %678 = vmatpush1.msra.mxu0 0.0
    %679 = vmatprep.subr.mxu0 0.0
    %680 = vmatpush1.msra.mxu0 0.0
    %681 = vmatprep.subr.mxu0 0.0
    %682 = vmatpush1.msra.mxu0 0.0
    %683 = vmatprep.subr.mxu0 0.0
    %684 = vmatpush1.msra.mxu0 0.0
    %685 = vmatprep.subr.mxu0 0.0
    %686 = vmatpush1.msra.mxu0 0.0
    %687 = vmatprep.subr.mxu0 0.0
    %688 = vmatpush1.msra.mxu0 0.0
    %689 = vmatprep.subr.mxu0 0.0
    %690 = vmatpush1.msra.mxu0 0.0
    %691 = vmatprep.subr.mxu0 0.0
    %692 = vmatpush1.msra.mxu0 0.0
    %693 = vmatprep.subr.mxu0 0.0
    %694 = vmatpush1.msra.mxu0 0.0
    %695 = vmatprep.subr.mxu0 0.0
    %696 = vmatpush1.msra.mxu0 0.0
    %697 = vmatprep.subr.mxu0 %v669
    %698 = vmatpush1.msra.mxu0 %v668
    %699 = vmatprep.subr.mxu0 %v667
    %700 = vmatpush1.msra.mxu0 %v666
    %701 = vmatprep.subr.mxu0 %v665
    %702 = vmatpush1.msra.mxu0 %v664
    %703 = vmatprep.subr.mxu0 %v663
    %704 = vmatpush1.msra.mxu0 %v662
    %705 = vmatprep.subr.mxu0 0.0
    %706 = vmatpush2.msra.mxu0 0.0
    %707 = vmatprep.subr.mxu0 0.0
    %708 = vmatpush2.msra.mxu0 0.0
    %709 = vmatprep.subr.mxu0 0.0
    %710 = vmatpush2.msra.mxu0 0.0
    %711 = vmatprep.subr.mxu0 0.0
    %712 = vmatpush2.msra.mxu0 0.0
    %713 = vmatprep.subr.mxu0 0.0
    %714 = vmatpush2.msra.mxu0 0.0
    %715 = vmatprep.subr.mxu0 0.0
    %716 = vmatpush2.msra.mxu0 0.0
    %717 = vmatprep.subr.mxu0 0.0
    %718 = vmatpush2.msra.mxu0 0.0
    %719 = vmatprep.subr.mxu0 0.0
    %720 = vmatpush2.msra.mxu0 0.0
    %721 = vmatprep.subr.mxu0 0.0
    %722 = vmatpush2.msra.mxu0 0.0
    %723 = vmatprep.subr.mxu0 0.0
    %724 = vmatpush2.msra.mxu0 0.0
    %725 = vmatprep.subr.mxu0 0.0
    %726 = vmatpush2.msra.mxu0 0.0
    %727 = vmatprep.subr.mxu0 0.0
    %728 = vmatpush2.msra.mxu0 0.0
    %729 = vmatprep.subr.mxu0 0.0
    %730 = vmatpush2.msra.mxu0 0.0
    %731 = vmatprep.subr.mxu0 0.0
    %732 = vmatpush2.msra.mxu0 0.0
    %733 = vmatprep.subr.mxu0 0.0
    %734 = vmatpush2.msra.mxu0 0.0
    %735 = vmatprep.subr.mxu0 0.0
    %736 = vmatpush2.msra.mxu0 0.0
    %737 = vmatprep.mubr.f32.mxu0 0.0
    %738 = vmatmul.mubr.f32.gmra.mxu0 %v671
    %v739 = vpop.f32.mrf.mxu0
    %v740 = vadd.f32 0.0, %v739
    %v741 = vpop.f32.mrf.mxu0
    %v742 = vadd.f32 0.0, %v741
    %743 = vdwg.mxu0
    %v744 = vadd.f32 %v587, %v740
    %v745 = vadd.f32 %v588, %v742
    %746 = vst [vmem:[%s7] sm:$0xff] %v744
    %747 = vst [vmem:[%s7 + $0x8] sm:$0xff] %v745
    // Predicated region
    $region34: #{gcn_forward.1} parent=1 // pred_check
      _
    $region35: #{gcn_forward.1} parent=1 // pred_check_branch
      %749 = sbr.rel (0) target = $region37
    $region36: #{gcn_forward.1} parent=1 // pred_region
      _
    $region37: #{gcn_forward.1} parent=1 // pred_fallthru
      _
    // Predicated region
    $region38: #{gcn_forward.1} parent=1 // pred_check
      _
    $region39: #{gcn_forward.1} parent=1 // pred_check_branch
      %751 = sbr.rel (0) target = $region41
    $region40: #{gcn_forward.1} parent=1 // pred_region
      _
    $region41: #{gcn_forward.1} parent=1 // pred_fallthru
      _
    %752 = vsyncpa [#allocation3], 1

</llo_original>
